<compile_context>
chip_gen: v5e
topology: v5e:2x2
jax: 0.10.0
libtpu: 0.0.40
codegen_flags: <defaults>
</compile_context>

<pallas_src>
import functools

import jax
import jax.numpy as jnp
from jax.experimental import pallas as pl
from jax.experimental.pallas import tpu as pltpu


def _relu_kernel(x_ref, o_ref):
    # Elementwise ReLU on the whole VMEM tile; scalar 0.0 lowers to a
    # splat-compare (no materialized zeros tile).
    o_ref[...] = jnp.maximum(x_ref[...], 0.0)


@functools.partial(jax.jit, donate_argnums=0)
def relu_pallas(x: jax.Array) -> jax.Array:
    """ReLU over an NCHW tensor via a lane-dense, minimally-tiled Pallas kernel."""
    orig_shape = x.shape

    # Collapse to 2D: rows = N*C, cols = H*W. Contiguous reshape == bitcast.
    if x.ndim >= 2:
        cols = orig_shape[-2] * orig_shape[-1]
        rows = x.size // cols
    else:
        cols = x.size
        rows = 1
    x2d = x.reshape(rows, cols)

    # Prefer 2 even blocks (balanced megacore split on v7x, still only 2 grid
    # steps of fixed overhead); otherwise a single whole-array block.
    if rows % 2 == 0 and (rows // 2) % 8 == 0:
        num_blocks = 2
    else:
        num_blocks = 1
    block_rows = rows // num_blocks

    out2d = pl.pallas_call(
        _relu_kernel,
        out_shape=jax.ShapeDtypeStruct(x2d.shape, x2d.dtype),
        grid_spec=pl.GridSpec(
            grid=(num_blocks,),
            # Last block dim == full array dim (3025) -> bypasses (8,128) rule,
            # no padding needed; sublane dim (32 or 64) is 8-aligned.
            in_specs=[pl.BlockSpec((block_rows, cols), lambda i: (i, 0))],
            out_specs=pl.BlockSpec((block_rows, cols), lambda i: (i, 0)),
        ),
        compiler_params=pltpu.CompilerParams(
            dimension_semantics=("parallel",),   # megacore sharding on v7x
        ),
        input_output_aliases={0: 0},             # with donation: true in-place
    )(x2d)

    return out2d.reshape(orig_shape)


if __name__ == "__main__":
    key = jax.random.PRNGKey(0)
    # Shape matches the PyTorch module's input: [1, 64, 55, 55] (~0.77 MB).
    x13 = jax.random.normal(key, (1, 64, 55, 55), dtype=jnp.float32)

    # Compute the reference BEFORE calling the kernel: x13's buffer is donated
    # into relu_pallas (matching ReLU(inplace=True) semantics).
    ref = jnp.maximum(x13, 0.0)
    jax.block_until_ready(ref)

    x14 = relu_pallas(x13)
    jax.block_until_ready(x14)

    assert x14.shape == ref.shape and x14.dtype == ref.dtype
    assert jnp.array_equal(x14, ref), "mismatch vs reference ReLU"

    print("KERNEL_OK")
</pallas_src>

<mosaic_0001>
module attributes {stable_mosaic.version = 11 : i64} {
  func.func @_relu_kernel(%arg0: i32, %arg1: memref<32x3025xf32, #tpu.memory_space<vmem>>, %arg2: memref<32x3025xf32, #tpu.memory_space<vmem>>) attributes {dimension_semantics = [#tpu.dimension_semantics<parallel>], iteration_bounds = array<i64: 2>, scalar_prefetch = 0 : i64, scratch_operands = 0 : i64, tpu.core_type = #tpu.core_type<tc>, window_params = [{transform_indices = @transform_0, window_bounds = array<i64: 32, 3025>}, {transform_indices = @transform_1, window_bounds = array<i64: 32, 3025>}]} {
    %c0 = arith.constant 0 : index
    %c0_0 = arith.constant 0 : index
    %0 = vector.load %arg1[%c0, %c0_0] : memref<32x3025xf32, #tpu.memory_space<vmem>>, vector<32x3025xf32>
    %cst = arith.constant 0.000000e+00 : f32
    %1 = vector.broadcast %cst : f32 to vector<32x3025xf32>
    %2 = arith.maximumf %0, %1 : vector<32x3025xf32>
    %c0_1 = arith.constant 0 : index
    %c0_2 = arith.constant 0 : index
    %3 = vector.load %arg2[%c0_1, %c0_2] : memref<32x3025xf32, #tpu.memory_space<vmem>>, vector<32x3025xf32>
    tpu.vector_store %arg2[%c0_1, %c0_2], %2 {strides = array<i32>} : memref<32x3025xf32, #tpu.memory_space<vmem>>, vector<32x3025xf32>,
    return
  }
  func.func @transform_0(%arg0: i32) -> (i32, i32) {
    %c0_i32 = arith.constant 0 : i32
    %c0_i32_0 = arith.constant 0 : i32
    return %arg0, %c0_i32 : i32, i32
  }
  func.func @transform_1(%arg0: i32) -> (i32, i32) {
    %c0_i32 = arith.constant 0 : i32
    %c0_i32_0 = arith.constant 0 : i32
    return %arg0, %c0_i32 : i32, i32
  }
}

</mosaic_0001>

<llo_original>
// kernel: relu_pallas.1
$region0: #{relu_pallas.1}
  #allocation0 [shape = 'u32[]', space=smem, size = 0x4, offset = 0x4, fixed_abs, tag = 'smem constant byte address 0x4 - core index']
  #allocation1 [shape = 'u32[72,128]{1,0:T(1,128)}', space=vmem, size = 0x9000, scoped, tag = 'internal scratch']
  %s0 = inlined_call_operand.vmem [shape: f32[64,3025], index: 0, kind: input, shape index: {}, may-alias: {0,1}]
  %s1 = inlined_call_operand.vmem [shape: f32[64,3025], index: 1, kind: output, shape index: {}, may-alias: {0,1}]
  %s2 = sld [smem:[#allocation0]]
  $region37: #{relu_pallas.1} parent=0
    _
  %s4 = ssub.s32 1, %s2
  %s5 = scalar_select 0, %s4, %s2
  loop: start=0, step=1, limit=4
  $region2: #{relu_pallas.1} parent=0 // loop_pre_header
    _
  $region3: #{relu_pallas.1} parent=0 // loop_header
    %s7 = sphi 0, %s11
    %p8 = scmp.ge.s32.totalorder %s7, 4
    %s17 = sphi 0, %s19
    %s20 = sphi 0, %s17
    %s21 = sphi 0, %s20
    %s37 = sphi 0, %s21
    %s43 = sphi 0, %s45
    %s46 = sphi 0, %s43
    %s47 = sphi 0, %s46
    %s63 = sphi 0, %s47
  $region4: #{relu_pallas.1} parent=0 // loop_header_branch
    %10 = sbr.rel (%p8) target = $region8
  $region5: #{relu_pallas.1} parent=0 // loop_body
    %s12 = ssub.s32 %s7, 1
    %s13 = ssub.s32 %s7, 2
    %s14 = sadd.s32 %s7, 1
    %s15 = ssub.s32 %s7, %s14
    %p16 = scmp.eq.s32.totalorder %s15, 0
    %s18 = sadd.s32 %s17, 1
    %s19 = scalar_select %p16, %s17, %s18
    %p22 = pneg %p16
    %p23 = scmp.eq.s32.totalorder %s7, 1
    %p24 = por %p22, %p23
    %p25 = scmp.ne.s32.totalorder %s17, %s20
    %p26 = scmp.eq.s32.totalorder %s7, 0
    %p27 = por %p25, %p26
    %p28 = scmp.ne.s32.totalorder %s17, %s20
    %p29 = scmp.eq.s32.totalorder %s12, 1
    %p30 = por %p28, %p29
    %p31 = scmp.ne.s32.totalorder %s20, %s21
    %p32 = scmp.eq.s32.totalorder %s12, 0
    %p33 = por %p31, %p32
    %p34 = scmp.ne.s32.totalorder %s20, %s21
    %p35 = scmp.eq.s32.totalorder %s13, 1
    %p36 = por %p34, %p35
    %p38 = scmp.ne.s32.totalorder %s21, %s37
    %p39 = scmp.eq.s32.totalorder %s13, 0
    %p40 = por %p38, %p39
    %s41 = ssub.s32 %s7, %s14
    %p42 = scmp.eq.s32.totalorder %s41, 0
    %s44 = sadd.s32 %s43, 1
    %s45 = scalar_select %p42, %s43, %s44
    %p48 = pneg %p42
    %p49 = scmp.eq.s32.totalorder %s7, 1
    %p50 = por %p48, %p49
    %p51 = scmp.ne.s32.totalorder %s43, %s46
    %p52 = scmp.eq.s32.totalorder %s7, 0
    %p53 = por %p51, %p52
    %p54 = scmp.ne.s32.totalorder %s43, %s46
    %p55 = scmp.eq.s32.totalorder %s12, 1
    %p56 = por %p54, %p55
    %p57 = scmp.ne.s32.totalorder %s46, %s47
    %p58 = scmp.eq.s32.totalorder %s12, 0
    %p59 = por %p57, %p58
    %p60 = scmp.ne.s32.totalorder %s46, %s47
    %p61 = scmp.eq.s32.totalorder %s13, 1
    %p62 = por %p60, %p61
    %p64 = scmp.ne.s32.totalorder %s47, %s63
    %p65 = scmp.eq.s32.totalorder %s13, 0
    %p66 = por %p64, %p65
    %p67 = scmp.le.s32.totalorder 1, %s7
    %p68 = scmp.lt.s32.totalorder %s7, 3
    %p69 = pnand %p67, %p68
    %p70 = pneg %p69
    // Predicated region
    $region9: #{relu_pallas.1} parent=5 // pred_check
      _
    $region10: #{relu_pallas.1} parent=5 // pred_check_branch
      %72 = sbr.rel (%p69) target = $region12
    $region11: #{relu_pallas.1} parent=5 // pred_region
      %s73 = ssub.s32 %s7, 1
    $region12: #{relu_pallas.1} parent=5 // pred_fallthru
      _
    %p74 = scmp.lt.s32.totalorder %s7, 2
    // Predicated region
    $region13: #{relu_pallas.1} parent=5 // pred_check
      %p75 = pneg %p74
    $region14: #{relu_pallas.1} parent=5 // pred_check_branch
      %77 = sbr.rel (%p75) target = $region16
    $region15: #{relu_pallas.1} parent=5 // pred_region
      // Predicated region
      $region17: #{relu_pallas.1} parent=15 // pred_check
        %p78 = pneg %p27
      $region18: #{relu_pallas.1} parent=15 // pred_check_branch
        %80 = sbr.rel (%p78) target = $region20
      $region19: #{relu_pallas.1} parent=15 // pred_region
        %s81 = smul.u32 4, %s7
        %p82 = scmp.lt.s32.totalorder %s81, 7
        %s83 = scalar_select %p82, %s81, 7
        %s84 = smul.addr %s83, 24
        %s85 = smul.addr %s84, 8
        %s86 = scalar_lea.vmem %s0, %s85
        %s87 = smul.u32 4, %s7
      $region20: #{relu_pallas.1} parent=15 // pred_fallthru
        _
    $region16: #{relu_pallas.1} parent=5 // pred_fallthru
      _
    %p88 = scmp.le.s32.totalorder 1, %s7
    %p89 = scmp.lt.s32.totalorder %s7, 3
    %p90 = pnand %p88, %p89
    %p91 = pneg %p90
    // Predicated region
    $region21: #{relu_pallas.1} parent=5 // pred_check
      _
    $region22: #{relu_pallas.1} parent=5 // pred_check_branch
      %93 = sbr.rel (%p90) target = $region24
    $region23: #{relu_pallas.1} parent=5 // pred_region
      %s94 = ssub.s32 %s7, 1
      %s95 = smul.u32 4, %s12
      %p96 = scmp.lt.s32.totalorder %s95, 7
      %s97 = scalar_select %p96, %s95, 7
      %s98 = smul.addr %s97, 24
      %s99 = smul.addr %s98, 8
      %s100 = scalar_lea.vmem %s0, %s99
      %p101 = pneg %p33
      %p102 = pneg %p30
      %p103 = pneg %p59
      %p104 = pneg %p56
      %s105 = smul.u32 4, %s12
      %p106 = scmp.lt.s32.totalorder %s105, 7
      %s107 = scalar_select %p106, %s105, 7
      %s108 = smul.addr %s107, 24
      %s109 = smul.addr %s108, 8
      %s110 = scalar_lea.vmem %s1, %s109
      %s111 = smul.u32 4, %s12
      %p112 = scmp.lt.s32.totalorder %s111, 7
      %s113 = scalar_select %p112, %s111, 7
      %s114 = smul.addr %s113, 24
      %s115 = smul.addr %s114, 8
      %s116 = scalar_lea.vmem %s0, %s115
      %s117 = smul.u32 4, %s12
      %s118 = smul.u32 4, %s12
      %p119 = scmp.lt.s32.totalorder %s118, 7
      %s120 = scalar_select %p119, %s118, 7
      %s121 = smul.addr %s120, 24
      %s122 = smul.addr %s121, 8
      %s123 = scalar_lea.vmem %s1, %s122
      %s124 = smul.u32 4, %s12
      %v125 = vld [vmem:[%s116] sm:$0xff]
      %v126 = vld [vmem:[%s116 + $0x8] sm:$0xff]
      %v127 = vld [vmem:[%s116 + $0x10] sm:$0xff]
      %v128 = vld [vmem:[%s116 + $0x18] sm:$0xff]
      %v129 = vld [vmem:[%s116 + $0x20] sm:$0xff]
      %v130 = vld [vmem:[%s116 + $0x28] sm:$0xff]
      %v131 = vld [vmem:[%s116 + $0x30] sm:$0xff]
      %v132 = vld [vmem:[%s116 + $0x38] sm:$0xff]
      %v133 = vld [vmem:[%s116 + $0x40] sm:$0xff]
      %v134 = vld [vmem:[%s116 + $0x48] sm:$0xff]
      %v135 = vld [vmem:[%s116 + $0x50] sm:$0xff]
      %v136 = vld [vmem:[%s116 + $0x58] sm:$0xff]
      %v137 = vld [vmem:[%s116 + $0x60] sm:$0xff]
      %v138 = vld [vmem:[%s116 + $0x68] sm:$0xff]
      %v139 = vld [vmem:[%s116 + $0x70] sm:$0xff]
      %v140 = vld [vmem:[%s116 + $0x78] sm:$0xff]
      %v141 = vld [vmem:[%s116 + $0x80] sm:$0xff]
      %v142 = vld [vmem:[%s116 + $0x88] sm:$0xff]
      %v143 = vld [vmem:[%s116 + $0x90] sm:$0xff]
      %v144 = vld [vmem:[%s116 + $0x98] sm:$0xff]
      %v145 = vld [vmem:[%s116 + $0xa0] sm:$0xff]
      %v146 = vld [vmem:[%s116 + $0xa8] sm:$0xff]
      %v147 = vld [vmem:[%s116 + $0xb0] sm:$0xff]
      %v148 = vld [vmem:[%s116 + $0xb8] sm:$0xff]
      %v149 = vld [vmem:[%s116 + $0xc0] sm:$0xff]
      %v150 = vld [vmem:[%s116 + $0xc8] sm:$0xff]
      %v151 = vld [vmem:[%s116 + $0xd0] sm:$0xff]
      %v152 = vld [vmem:[%s116 + $0xd8] sm:$0xff]
      %v153 = vld [vmem:[%s116 + $0xe0] sm:$0xff]
      %v154 = vld [vmem:[%s116 + $0xe8] sm:$0xff]
      %v155 = vld [vmem:[%s116 + $0xf0] sm:$0xff]
      %v156 = vld [vmem:[%s116 + $0xf8] sm:$0xff]
      %v157 = vld [vmem:[%s116 + $0x100] sm:$0xff]
      %v158 = vld [vmem:[%s116 + $0x108] sm:$0xff]
      %v159 = vld [vmem:[%s116 + $0x110] sm:$0xff]
      %v160 = vld [vmem:[%s116 + $0x118] sm:$0xff]
      %v161 = vld [vmem:[%s116 + $0x120] sm:$0xff]
      %v162 = vld [vmem:[%s116 + $0x128] sm:$0xff]
      %v163 = vld [vmem:[%s116 + $0x130] sm:$0xff]
      %v164 = vld [vmem:[%s116 + $0x138] sm:$0xff]
      %v165 = vld [vmem:[%s116 + $0x140] sm:$0xff]
      %v166 = vld [vmem:[%s116 + $0x148] sm:$0xff]
      %v167 = vld [vmem:[%s116 + $0x150] sm:$0xff]
      %v168 = vld [vmem:[%s116 + $0x158] sm:$0xff]
      %v169 = vld [vmem:[%s116 + $0x160] sm:$0xff]
      %v170 = vld [vmem:[%s116 + $0x168] sm:$0xff]
      %v171 = vld [vmem:[%s116 + $0x170] sm:$0xff]
      %v172 = vld [vmem:[%s116 + $0x178] sm:$0xff]
      %v173 = vld [vmem:[%s116 + $0x180] sm:$0xff]
      %v174 = vld [vmem:[%s116 + $0x188] sm:$0xff]
      %v175 = vld [vmem:[%s116 + $0x190] sm:$0xff]
      %v176 = vld [vmem:[%s116 + $0x198] sm:$0xff]
      %v177 = vld [vmem:[%s116 + $0x1a0] sm:$0xff]
      %v178 = vld [vmem:[%s116 + $0x1a8] sm:$0xff]
      %v179 = vld [vmem:[%s116 + $0x1b0] sm:$0xff]
      %v180 = vld [vmem:[%s116 + $0x1b8] sm:$0xff]
      %v181 = vld [vmem:[%s116 + $0x1c0] sm:$0xff]
      %v182 = vld [vmem:[%s116 + $0x1c8] sm:$0xff]
      %v183 = vld [vmem:[%s116 + $0x1d0] sm:$0xff]
      %v184 = vld [vmem:[%s116 + $0x1d8] sm:$0xff]
      %v185 = vld [vmem:[%s116 + $0x1e0] sm:$0xff]
      %v186 = vld [vmem:[%s116 + $0x1e8] sm:$0xff]
      %v187 = vld [vmem:[%s116 + $0x1f0] sm:$0xff]
      %v188 = vld [vmem:[%s116 + $0x1f8] sm:$0xff]
      %v189 = vld [vmem:[%s116 + $0x200] sm:$0xff]
      %v190 = vld [vmem:[%s116 + $0x208] sm:$0xff]
      %v191 = vld [vmem:[%s116 + $0x210] sm:$0xff]
      %v192 = vld [vmem:[%s116 + $0x218] sm:$0xff]
      %v193 = vld [vmem:[%s116 + $0x220] sm:$0xff]
      %v194 = vld [vmem:[%s116 + $0x228] sm:$0xff]
      %v195 = vld [vmem:[%s116 + $0x230] sm:$0xff]
      %v196 = vld [vmem:[%s116 + $0x238] sm:$0xff]
      %v197 = vld [vmem:[%s116 + $0x240] sm:$0xff]
      %v198 = vld [vmem:[%s116 + $0x248] sm:$0xff]
      %v199 = vld [vmem:[%s116 + $0x250] sm:$0xff]
      %v200 = vld [vmem:[%s116 + $0x258] sm:$0xff]
      %v201 = vld [vmem:[%s116 + $0x260] sm:$0xff]
      %v202 = vld [vmem:[%s116 + $0x268] sm:$0xff]
      %v203 = vld [vmem:[%s116 + $0x270] sm:$0xff]
      %v204 = vld [vmem:[%s116 + $0x278] sm:$0xff]
      %v205 = vld [vmem:[%s116 + $0x280] sm:$0xff]
      %v206 = vld [vmem:[%s116 + $0x288] sm:$0xff]
      %v207 = vld [vmem:[%s116 + $0x290] sm:$0xff]
      %v208 = vld [vmem:[%s116 + $0x298] sm:$0xff]
      %v209 = vld [vmem:[%s116 + $0x2a0] sm:$0xff]
      %v210 = vld [vmem:[%s116 + $0x2a8] sm:$0xff]
      %v211 = vld [vmem:[%s116 + $0x2b0] sm:$0xff]
      %v212 = vld [vmem:[%s116 + $0x2b8] sm:$0xff]
      %v213 = vld [vmem:[%s116 + $0x2c0] sm:$0xff]
      %v214 = vld [vmem:[%s116 + $0x2c8] sm:$0xff]
      %v215 = vld [vmem:[%s116 + $0x2d0] sm:$0xff]
      %v216 = vld [vmem:[%s116 + $0x2d8] sm:$0xff]
      %v217 = vld [vmem:[%s116 + $0x2e0] sm:$0xff]
      %v218 = vld [vmem:[%s116 + $0x2e8] sm:$0xff]
      %v219 = vld [vmem:[%s116 + $0x2f0] sm:$0xff]
      %v220 = vld [vmem:[%s116 + $0x2f8] sm:$0xff]
      %v221 = vmax.f32 %v125, 0.0
      %v222 = vmax.f32 %v126, 0.0
      %v223 = vmax.f32 %v127, 0.0
      %v224 = vmax.f32 %v128, 0.0
      %v225 = vmax.f32 %v129, 0.0
      %v226 = vmax.f32 %v130, 0.0
      %v227 = vmax.f32 %v131, 0.0
      %v228 = vmax.f32 %v132, 0.0
      %v229 = vmax.f32 %v133, 0.0
      %v230 = vmax.f32 %v134, 0.0
      %v231 = vmax.f32 %v135, 0.0
      %v232 = vmax.f32 %v136, 0.0
      %v233 = vmax.f32 %v137, 0.0
      %v234 = vmax.f32 %v138, 0.0
      %v235 = vmax.f32 %v139, 0.0
      %v236 = vmax.f32 %v140, 0.0
      %v237 = vmax.f32 %v141, 0.0
      %v238 = vmax.f32 %v142, 0.0
      %v239 = vmax.f32 %v143, 0.0
      %v240 = vmax.f32 %v144, 0.0
      %v241 = vmax.f32 %v145, 0.0
      %v242 = vmax.f32 %v146, 0.0
      %v243 = vmax.f32 %v147, 0.0
      %v244 = vmax.f32 %v148, 0.0
      %v245 = vmax.f32 %v149, 0.0
      %v246 = vmax.f32 %v150, 0.0
      %v247 = vmax.f32 %v151, 0.0
      %v248 = vmax.f32 %v152, 0.0
      %v249 = vmax.f32 %v153, 0.0
      %v250 = vmax.f32 %v154, 0.0
      %v251 = vmax.f32 %v155, 0.0
      %v252 = vmax.f32 %v156, 0.0
      %v253 = vmax.f32 %v157, 0.0
      %v254 = vmax.f32 %v158, 0.0
      %v255 = vmax.f32 %v159, 0.0
      %v256 = vmax.f32 %v160, 0.0
      %v257 = vmax.f32 %v161, 0.0
      %v258 = vmax.f32 %v162, 0.0
      %v259 = vmax.f32 %v163, 0.0
      %v260 = vmax.f32 %v164, 0.0
      %v261 = vmax.f32 %v165, 0.0
      %v262 = vmax.f32 %v166, 0.0
      %v263 = vmax.f32 %v167, 0.0
      %v264 = vmax.f32 %v168, 0.0
      %v265 = vmax.f32 %v169, 0.0
      %v266 = vmax.f32 %v170, 0.0
      %v267 = vmax.f32 %v171, 0.0
      %v268 = vmax.f32 %v172, 0.0
      %v269 = vmax.f32 %v173, 0.0
      %v270 = vmax.f32 %v174, 0.0
      %v271 = vmax.f32 %v175, 0.0
      %v272 = vmax.f32 %v176, 0.0
      %v273 = vmax.f32 %v177, 0.0
      %v274 = vmax.f32 %v178, 0.0
      %v275 = vmax.f32 %v179, 0.0
      %v276 = vmax.f32 %v180, 0.0
      %v277 = vmax.f32 %v181, 0.0
      %v278 = vmax.f32 %v182, 0.0
      %v279 = vmax.f32 %v183, 0.0
      %v280 = vmax.f32 %v184, 0.0
      %v281 = vmax.f32 %v185, 0.0
      %v282 = vmax.f32 %v186, 0.0
      %v283 = vmax.f32 %v187, 0.0
      %v284 = vmax.f32 %v188, 0.0
      %v285 = vmax.f32 %v189, 0.0
      %v286 = vmax.f32 %v190, 0.0
      %v287 = vmax.f32 %v191, 0.0
      %v288 = vmax.f32 %v192, 0.0
      %v289 = vmax.f32 %v193, 0.0
      %v290 = vmax.f32 %v194, 0.0
      %v291 = vmax.f32 %v195, 0.0
      %v292 = vmax.f32 %v196, 0.0
      %v293 = vmax.f32 %v197, 0.0
      %v294 = vmax.f32 %v198, 0.0
      %v295 = vmax.f32 %v199, 0.0
      %v296 = vmax.f32 %v200, 0.0
      %v297 = vmax.f32 %v201, 0.0
      %v298 = vmax.f32 %v202, 0.0
      %v299 = vmax.f32 %v203, 0.0
      %v300 = vmax.f32 %v204, 0.0
      %v301 = vmax.f32 %v205, 0.0
      %v302 = vmax.f32 %v206, 0.0
      %v303 = vmax.f32 %v207, 0.0
      %v304 = vmax.f32 %v208, 0.0
      %v305 = vmax.f32 %v209, 0.0
      %v306 = vmax.f32 %v210, 0.0
      %v307 = vmax.f32 %v211, 0.0
      %v308 = vmax.f32 %v212, 0.0
      %v309 = vmax.f32 %v213, 0.0
      %v310 = vmax.f32 %v214, 0.0
      %v311 = vmax.f32 %v215, 0.0
      %v312 = vmax.f32 %v216, 0.0
      %v313 = vmax.f32 %v217, 0.0
      %v314 = vmax.f32 %v218, 0.0
      %v315 = vmax.f32 %v219, 0.0
      %v316 = vmax.f32 %v220, 0.0
      %317 = vst [vmem:[%s123] sm:$0xff] %v221
      %318 = vst [vmem:[%s123 + $0x8] sm:$0xff] %v222
      %319 = vst [vmem:[%s123 + $0x10] sm:$0xff] %v223
      %320 = vst [vmem:[%s123 + $0x18] sm:$0xff] %v224
      %321 = vst [vmem:[%s123 + $0x20] sm:$0xff] %v225
      %322 = vst [vmem:[%s123 + $0x28] sm:$0xff] %v226
      %323 = vst [vmem:[%s123 + $0x30] sm:$0xff] %v227
      %324 = vst [vmem:[%s123 + $0x38] sm:$0xff] %v228
      %325 = vst [vmem:[%s123 + $0x40] sm:$0xff] %v229
      %326 = vst [vmem:[%s123 + $0x48] sm:$0xff] %v230
      %327 = vst [vmem:[%s123 + $0x50] sm:$0xff] %v231
      %328 = vst [vmem:[%s123 + $0x58] sm:$0xff] %v232
      %329 = vst [vmem:[%s123 + $0x60] sm:$0xff] %v233
      %330 = vst [vmem:[%s123 + $0x68] sm:$0xff] %v234
      %331 = vst [vmem:[%s123 + $0x70] sm:$0xff] %v235
      %332 = vst [vmem:[%s123 + $0x78] sm:$0xff] %v236
      %333 = vst [vmem:[%s123 + $0x80] sm:$0xff] %v237
      %334 = vst [vmem:[%s123 + $0x88] sm:$0xff] %v238
      %335 = vst [vmem:[%s123 + $0x90] sm:$0xff] %v239
      %336 = vst [vmem:[%s123 + $0x98] sm:$0xff] %v240
      %337 = vst [vmem:[%s123 + $0xa0] sm:$0xff] %v241
      %338 = vst [vmem:[%s123 + $0xa8] sm:$0xff] %v242
      %339 = vst [vmem:[%s123 + $0xb0] sm:$0xff] %v243
      %vm340 = vcmask 662528
      %341 = vst.msk [vmem:[%s123 + $0xb8] sm:$0xff] %vm340, %v244
      %342 = vst [vmem:[%s123 + $0xc0] sm:$0xff] %v245
      %343 = vst [vmem:[%s123 + $0xc8] sm:$0xff] %v246
      %344 = vst [vmem:[%s123 + $0xd0] sm:$0xff] %v247
      %345 = vst [vmem:[%s123 + $0xd8] sm:$0xff] %v248
      %346 = vst [vmem:[%s123 + $0xe0] sm:$0xff] %v249
      %347 = vst [vmem:[%s123 + $0xe8] sm:$0xff] %v250
      %348 = vst [vmem:[%s123 + $0xf0] sm:$0xff] %v251
      %349 = vst [vmem:[%s123 + $0xf8] sm:$0xff] %v252
      %350 = vst [vmem:[%s123 + $0x100] sm:$0xff] %v253
      %351 = vst [vmem:[%s123 + $0x108] sm:$0xff] %v254
      %352 = vst [vmem:[%s123 + $0x110] sm:$0xff] %v255
      %353 = vst [vmem:[%s123 + $0x118] sm:$0xff] %v256
      %354 = vst [vmem:[%s123 + $0x120] sm:$0xff] %v257
      %355 = vst [vmem:[%s123 + $0x128] sm:$0xff] %v258
      %356 = vst [vmem:[%s123 + $0x130] sm:$0xff] %v259
      %357 = vst [vmem:[%s123 + $0x138] sm:$0xff] %v260
      %358 = vst [vmem:[%s123 + $0x140] sm:$0xff] %v261
      %359 = vst [vmem:[%s123 + $0x148] sm:$0xff] %v262
      %360 = vst [vmem:[%s123 + $0x150] sm:$0xff] %v263
      %361 = vst [vmem:[%s123 + $0x158] sm:$0xff] %v264
      %362 = vst [vmem:[%s123 + $0x160] sm:$0xff] %v265
      %363 = vst [vmem:[%s123 + $0x168] sm:$0xff] %v266
      %364 = vst [vmem:[%s123 + $0x170] sm:$0xff] %v267
      %365 = vst.msk [vmem:[%s123 + $0x178] sm:$0xff] %vm340, %v268
      %366 = vst [vmem:[%s123 + $0x180] sm:$0xff] %v269
      %367 = vst [vmem:[%s123 + $0x188] sm:$0xff] %v270
      %368 = vst [vmem:[%s123 + $0x190] sm:$0xff] %v271
      %369 = vst [vmem:[%s123 + $0x198] sm:$0xff] %v272
      %370 = vst [vmem:[%s123 + $0x1a0] sm:$0xff] %v273
      %371 = vst [vmem:[%s123 + $0x1a8] sm:$0xff] %v274
      %372 = vst [vmem:[%s123 + $0x1b0] sm:$0xff] %v275
      %373 = vst [vmem:[%s123 + $0x1b8] sm:$0xff] %v276
      %374 = vst [vmem:[%s123 + $0x1c0] sm:$0xff] %v277
      %375 = vst [vmem:[%s123 + $0x1c8] sm:$0xff] %v278
      %376 = vst [vmem:[%s123 + $0x1d0] sm:$0xff] %v279
      %377 = vst [vmem:[%s123 + $0x1d8] sm:$0xff] %v280
      %378 = vst [vmem:[%s123 + $0x1e0] sm:$0xff] %v281
      %379 = vst [vmem:[%s123 + $0x1e8] sm:$0xff] %v282
      %380 = vst [vmem:[%s123 + $0x1f0] sm:$0xff] %v283
      %381 = vst [vmem:[%s123 + $0x1f8] sm:$0xff] %v284
      %382 = vst [vmem:[%s123 + $0x200] sm:$0xff] %v285
      %383 = vst [vmem:[%s123 + $0x208] sm:$0xff] %v286
      %384 = vst [vmem:[%s123 + $0x210] sm:$0xff] %v287
      %385 = vst [vmem:[%s123 + $0x218] sm:$0xff] %v288
      %386 = vst [vmem:[%s123 + $0x220] sm:$0xff] %v289
      %387 = vst [vmem:[%s123 + $0x228] sm:$0xff] %v290
      %388 = vst [vmem:[%s123 + $0x230] sm:$0xff] %v291
      %389 = vst.msk [vmem:[%s123 + $0x238] sm:$0xff] %vm340, %v292
      %390 = vst [vmem:[%s123 + $0x240] sm:$0xff] %v293
      %391 = vst [vmem:[%s123 + $0x248] sm:$0xff] %v294
      %392 = vst [vmem:[%s123 + $0x250] sm:$0xff] %v295
      %393 = vst [vmem:[%s123 + $0x258] sm:$0xff] %v296
      %394 = vst [vmem:[%s123 + $0x260] sm:$0xff] %v297
      %395 = vst [vmem:[%s123 + $0x268] sm:$0xff] %v298
      %396 = vst [vmem:[%s123 + $0x270] sm:$0xff] %v299
      %397 = vst [vmem:[%s123 + $0x278] sm:$0xff] %v300
      %398 = vst [vmem:[%s123 + $0x280] sm:$0xff] %v301
      %399 = vst [vmem:[%s123 + $0x288] sm:$0xff] %v302
      %400 = vst [vmem:[%s123 + $0x290] sm:$0xff] %v303
      %401 = vst [vmem:[%s123 + $0x298] sm:$0xff] %v304
      %402 = vst [vmem:[%s123 + $0x2a0] sm:$0xff] %v305
      %403 = vst [vmem:[%s123 + $0x2a8] sm:$0xff] %v306
      %404 = vst [vmem:[%s123 + $0x2b0] sm:$0xff] %v307
      %405 = vst [vmem:[%s123 + $0x2b8] sm:$0xff] %v308
      %406 = vst [vmem:[%s123 + $0x2c0] sm:$0xff] %v309
      %407 = vst [vmem:[%s123 + $0x2c8] sm:$0xff] %v310
      %408 = vst [vmem:[%s123 + $0x2d0] sm:$0xff] %v311
      %409 = vst [vmem:[%s123 + $0x2d8] sm:$0xff] %v312
      %410 = vst [vmem:[%s123 + $0x2e0] sm:$0xff] %v313
      %411 = vst [vmem:[%s123 + $0x2e8] sm:$0xff] %v314
      %412 = vst [vmem:[%s123 + $0x2f0] sm:$0xff] %v315
      %413 = vst.msk [vmem:[%s123 + $0x2f8] sm:$0xff] %vm340, %v316
      %s414 = smul.u32 4, %s12
      %p415 = scmp.lt.s32.totalorder %s414, 7
      %s416 = scalar_select %p415, %s414, 7
      %s417 = smul.addr %s416, 24
      %s418 = smul.addr %s417, 8
      %s419 = scalar_lea.vmem %s1, %s418
      // Predicated region
      $region25: #{relu_pallas.1} parent=23 // pred_check
        %p420 = pneg %p56
      $region26: #{relu_pallas.1} parent=23 // pred_check_branch
        %422 = sbr.rel (%p420) target = $region28
      $region27: #{relu_pallas.1} parent=23 // pred_region
        %s423 = smul.u32 4, %s12
      $region28: #{relu_pallas.1} parent=23 // pred_fallthru
        _
    $region24: #{relu_pallas.1} parent=5 // pred_fallthru
      _
    %p424 = scmp.le.s32.totalorder 2, %s7
    // Predicated region
    $region29: #{relu_pallas.1} parent=5 // pred_check
      %p425 = pneg %p424
    $region30: #{relu_pallas.1} parent=5 // pred_check_branch
      %427 = sbr.rel (%p425) target = $region32
    $region31: #{relu_pallas.1} parent=5 // pred_region
      %s428 = ssub.s32 %s7, 2
      // Predicated region
      $region33: #{relu_pallas.1} parent=31 // pred_check
        %p429 = pneg %p62
      $region34: #{relu_pallas.1} parent=31 // pred_check_branch
        %431 = sbr.rel (%p429) target = $region36
      $region35: #{relu_pallas.1} parent=31 // pred_region
        %s432 = smul.u32 4, %s13
        %p433 = scmp.lt.s32.totalorder %s432, 7
        %s434 = scalar_select %p433, %s432, 7
        %s435 = smul.addr %s434, 24
        %s436 = smul.addr %s435, 8
        %s437 = scalar_lea.vmem %s1, %s436
      $region36: #{relu_pallas.1} parent=31 // pred_fallthru
        _
    $region32: #{relu_pallas.1} parent=5 // pred_fallthru
      _
  $region6: #{relu_pallas.1} parent=0 // loop_footer
    %s11 = sadd.s32 1, %s7
  $region7: #{relu_pallas.1} parent=0 // loop_footer_branch
    %6 = sbr.rel target = $region3
  $region8: #{relu_pallas.1} parent=0 // loop_exit
    _

</llo_original>
